<compile_context>
chip_gen: v6e
topology: v6e:2x2x1
jax: 0.10.0
libtpu: 0.0.40
codegen_flags: <defaults>
</compile_context>

<pallas_src>
import functools
import math

import jax
import jax.numpy as jnp
from jax.experimental import pallas as pl
from jax.experimental.pallas import tpu as pltpu


def _round_up(n, m):
    return (n + m - 1) // m * m


def _cdiv(a, b):
    return (a + b - 1) // b


def _tpu_generation():
    """Best-effort TPU generation detection ('v5e' / 'v6e' / 'v7x' / 'other')."""
    try:
        kind = jax.devices()[0].device_kind.lower()
    except Exception:
        return "other"
    if "v5 lite" in kind or "v5e" in kind or "v5lite" in kind:
        return "v5e"
    if "v6" in kind:
        return "v6e"
    if "7x" in kind or "v7" in kind:
        return "v7x"
    return "other"


# Per-generation tiling targets and VMEM caps (bytes).
_GEN_PARAMS = {
    "v5e":   dict(tm_max=256,  th_max=256, vmem_cap=100 * 1024 * 1024, two_tc=False),
    "v6e":   dict(tm_max=1024, th_max=512, vmem_cap=100 * 1024 * 1024, two_tc=False),
    "v7x":   dict(tm_max=512,  th_max=256, vmem_cap=56 * 1024 * 1024,  two_tc=True),
    "other": dict(tm_max=256,  th_max=256, vmem_cap=56 * 1024 * 1024,  two_tc=False),
}


def select_hidden_tile(hidden_dim, generation=None):
    """Lane-aligned hidden tile size for this TPU generation."""
    gen = generation if generation is not None else _tpu_generation()
    p = _GEN_PARAMS.get(gen, _GEN_PARAMS["other"])
    return min(p["th_max"], _round_up(hidden_dim, 128))


def prepare_mistral_mlp_weights(w_gate, w_up, w_down, *, th,
                                compute_dtype=jnp.bfloat16):
    """Cast to compute_dtype, pad H to a multiple of th, and interleave
    gate/up per hidden tile: [g_tile0 | u_tile0 | g_tile1 | u_tile1 | ...].

    Call ONCE and cache the result: this hoists the weight cast/pad HBM
    traffic out of the per-step hot path.  Weights are (in, out)-layout
    (nn.Linear.weight transposed).
    Returns (w_gu, w_down_padded) with shapes (D, 2*H_pad) and (H_pad, D).
    """
    D, H = w_gate.shape
    H_pad = _round_up(H, th)
    wg = w_gate.astype(compute_dtype)
    wu = w_up.astype(compute_dtype)
    wd = w_down.astype(compute_dtype)
    if H_pad != H:
        wg = jnp.pad(wg, ((0, 0), (0, H_pad - H)))   # SiLU(0)*0 == 0
        wu = jnp.pad(wu, ((0, 0), (0, H_pad - H)))
        wd = jnp.pad(wd, ((0, H_pad - H), (0, 0)))   # zero rows add nothing
    n_h = H_pad // th
    w_gu = jnp.concatenate(
        [wg.reshape(D, n_h, th), wu.reshape(D, n_h, th)], axis=2
    ).reshape(D, 2 * H_pad)
    return w_gu, wd


def _mlp_kernel(x_ref, wgu_ref, wd_ref, o_ref, acc_ref, *, th):
    """One (row-tile, hidden-tile) step of down( SiLU(x@Wg) * (x@Wu) )."""
    j = pl.program_id(1)  # hidden (reduction) axis — last grid axis

    @pl.when(j == 0)
    def _():
        acc_ref[...] = jnp.zeros_like(acc_ref)

    x = x_ref[...]                                                       # (tm, D)
    # Fused gate|up matmul: one MXU push/drain + one weight DMA stream.
    gu = jnp.dot(x, wgu_ref[...], preferred_element_type=jnp.float32)   # (tm, 2*th)
    g = gu[:, :th]                                                       # static, lane-aligned
    u = gu[:, th:]
    h = (g * jax.nn.sigmoid(g)) * u                                      # SiLU(g)*u, f32
    acc_ref[...] += jnp.dot(h.astype(wd_ref.dtype), wd_ref[...],
                            preferred_element_type=jnp.float32)          # (tm, D) f32

    @pl.when(j == pl.num_programs(1) - 1)
    def _():
        o_ref[...] = acc_ref[...].astype(o_ref.dtype)


def _select_row_tile(M, gen_params, row_align):
    """Balance the row tile against M (avoid up-to-40% dead padded rows)."""
    tm_max = gen_params["tm_max"]
    n = max(1, _cdiv(M, tm_max))
    # v7x has 2 TensorCores: make sure the 'parallel' row axis has >=2 tiles.
    if gen_params["two_tc"] and n == 1 and M > row_align:
        n = 2
    return _round_up(_cdiv(M, n), row_align)


def _vmem_bytes(tm, th, D, compute_dtype):
    bpe = jnp.dtype(compute_dtype).itemsize
    return (2 * tm * D * bpe            # x tile (double-buffered)
            + 2 * D * 2 * th * bpe      # fused gate|up weight tile
            + 2 * th * D * bpe          # down weight tile
            + 2 * tm * D * bpe          # output tile (compute_dtype)
            + tm * D * 4                # f32 accumulator scratch
            + 4 * tm * th * 4)          # gu / h intermediates (compiler scratch)


@functools.partial(jax.jit, static_argnames=("th", "compute_dtype"))
def mistral_mlp_fused(x, w_gu, w_down, *, th, compute_dtype=jnp.bfloat16):
    """Fast path: x (..., D); w_gu (D, 2*H_pad) and w_down (H_pad, D) from
    prepare_mistral_mlp_weights (same th)."""
    orig_shape = x.shape
    D = x.shape[-1]
    H_pad = w_down.shape[0]
    assert w_gu.shape == (D, 2 * H_pad), (w_gu.shape, (D, 2 * H_pad))
    assert H_pad % th == 0
    M = math.prod(x.shape[:-1])
    out_dtype = x.dtype

    # --- generation-aware tile sizing / padding (static, trace-time) --------
    gen = _tpu_generation()
    p = _GEN_PARAMS.get(gen, _GEN_PARAMS["other"])
    row_align = 16 if jnp.dtype(compute_dtype).itemsize == 2 else 8
    tm = _select_row_tile(M, p, row_align)
    while tm > row_align and _vmem_bytes(tm, th, D, compute_dtype) > p["vmem_cap"]:
        tm = _round_up(_cdiv(tm, 2), row_align)
    M_pad = _round_up(M, tm)

    xc = x.reshape(M, D).astype(compute_dtype)
    if M_pad != M:
        xc = jnp.pad(xc, ((0, M_pad - M), (0, 0)))   # zero rows -> zero output

    n_rows = M_pad // tm
    n_h = H_pad // th

    vmem_est = _vmem_bytes(tm, th, D, compute_dtype)
    vmem_limit = int(min(max(int(1.5 * vmem_est) + 16 * 1024 * 1024,
                             32 * 1024 * 1024),
                         p["vmem_cap"]))

    kernel = functools.partial(_mlp_kernel, th=th)
    out2 = pl.pallas_call(
        kernel,
        out_shape=jax.ShapeDtypeStruct((M_pad, D), compute_dtype),
        grid_spec=pltpu.PrefetchScalarGridSpec(
            num_scalar_prefetch=0,
            grid=(n_rows, n_h),                                 # reduction axis last
            in_specs=[
                pl.BlockSpec((tm, D), lambda i, j: (i, 0)),     # x row tile
                pl.BlockSpec((D, 2 * th), lambda i, j: (0, j)), # fused gate|up H-tile
                pl.BlockSpec((th, D), lambda i, j: (j, 0)),     # W_down H-tile
            ],
            # lane-dense output: full D last dim, same block across the H axis
            out_specs=pl.BlockSpec((tm, D), lambda i, j: (i, 0)),
            scratch_shapes=[pltpu.VMEM((tm, D), jnp.float32)],
        ),
        compiler_params=pltpu.CompilerParams(
            dimension_semantics=("parallel", "arbitrary"),
            vmem_limit_bytes=vmem_limit),
    )(xc, w_gu, w_down)

    # TODO(synk): dropout (train mode) would be applied here with pltpu PRNG.
    return out2[:M].astype(out_dtype).reshape(orig_shape)


def mistral_mlp(x, w_gate, w_up, w_down, *, compute_dtype=jnp.bfloat16):
    """Convenience wrapper (prepares weights per call).  For production,
    call prepare_mistral_mlp_weights once, cache, then mistral_mlp_fused."""
    th = select_hidden_tile(w_gate.shape[1])
    w_gu, wd = prepare_mistral_mlp_weights(w_gate, w_up, w_down, th=th,
                                           compute_dtype=compute_dtype)
    return mistral_mlp_fused(x, w_gu, wd, th=th, compute_dtype=compute_dtype)


def _reference_f32(x, w_gate, w_up, w_down):
    g = x @ w_gate
    u = x @ w_up
    return (jax.nn.silu(g) * u) @ w_down


def _reference_mixed(x, w_gate, w_up, w_down, compute_dtype=jnp.bfloat16):
    """Mirrors the kernel's dtype path (bf16 in/out, f32 accumulation)."""
    xd = x.reshape(-1, x.shape[-1]).astype(compute_dtype)
    g = jnp.dot(xd, w_gate.astype(compute_dtype), preferred_element_type=jnp.float32)
    u = jnp.dot(xd, w_up.astype(compute_dtype), preferred_element_type=jnp.float32)
    h = (g * jax.nn.sigmoid(g)) * u
    o = jnp.dot(h.astype(compute_dtype), w_down.astype(compute_dtype),
                preferred_element_type=jnp.float32)
    return o.astype(compute_dtype).astype(x.dtype).reshape(x.shape)


if __name__ == "__main__":
    # Synthetic config (small shapes consistent with the module)
    B, T = 2, 8
    n_embd, hidden_dim = 128, 256

    key = jax.random.PRNGKey(0)
    kx, kg, ku, kd = jax.random.split(key, 4)

    x = jax.random.normal(kx, (B, T, n_embd), dtype=jnp.float32)
    # Deterministic "nn.Linear"-style weights, stored as (in, out) = W^T.
    w_gate = jax.random.normal(kg, (n_embd, hidden_dim), dtype=jnp.float32) * 0.02
    w_up   = jax.random.normal(ku, (n_embd, hidden_dim), dtype=jnp.float32) * 0.02
    w_down = jax.random.normal(kd, (hidden_dim, n_embd), dtype=jnp.float32) * 0.02

    # Hoist weight cast/pad/fusion out of the hot path (do once, reuse).
    th = select_hidden_tile(hidden_dim)
    w_gu, w_down_p = prepare_mistral_mlp_weights(w_gate, w_up, w_down, th=th)

    out = mistral_mlp_fused(x, w_gu, w_down_p, th=th)
    out = jax.block_until_ready(out)
    assert out.shape == (B, T, n_embd), out.shape

    # Tight check vs a reference with the same bf16/f32 dtype path.
    ref_q = _reference_mixed(x, w_gate, w_up, w_down)
    assert jnp.allclose(out, ref_q, atol=2e-3, rtol=2e-3), "mismatch vs mixed ref"

    # Loose sanity check vs the pure-f32 PyTorch-equivalent reference.
    ref_f = _reference_f32(x, w_gate, w_up, w_down)
    assert jnp.allclose(out, ref_f, atol=2e-2, rtol=2e-2), "mismatch vs f32 ref"

    # Convenience (unfused-prep) path also works.
    out2 = jax.block_until_ready(mistral_mlp(x, w_gate, w_up, w_down))
    assert jnp.allclose(out, out2), "fused vs convenience path mismatch"

    print("KERNEL_OK")
</pallas_src>

<mosaic_0001>
module attributes {stable_mosaic.version = 11 : i64} {
  func.func @_mlp_kernel(%arg0: i32, %arg1: i32, %arg2: memref<16x128xbf16, #tpu.memory_space<vmem>>, %arg3: memref<128x512xbf16, #tpu.memory_space<vmem>>, %arg4: memref<256x128xbf16, #tpu.memory_space<vmem>>, %arg5: memref<16x128xbf16, #tpu.memory_space<vmem>>, %arg6: memref<16x128xf32, #tpu.memory_space<vmem>>) attributes {dimension_semantics = [#tpu.dimension_semantics<parallel>, #tpu.dimension_semantics<arbitrary>], iteration_bounds = array<i64: 1, 1>, scalar_prefetch = 0 : i64, scratch_operands = 1 : i64, tpu.core_type = #tpu.core_type<tc>, window_params = [{transform_indices = @transform_0, window_bounds = array<i64: 16, 128>}, {transform_indices = @transform_1, window_bounds = array<i64: 128, 512>}, {transform_indices = @transform_2, window_bounds = array<i64: 256, 128>}, {transform_indices = @transform_3, window_bounds = array<i64: 16, 128>}]} {
    %c0_i32 = arith.constant 0 : i32
    %0 = arith.cmpi eq, %arg1, %c0_i32 : i32
    %1 = arith.extui %0 : i1 to i32
    %c0_i32_0 = arith.constant 0 : i32
    %2 = arith.cmpi ne, %1, %c0_i32_0 : i32
    scf.if %2 {
      %cst_14 = arith.constant 0.000000e+00 : f32
      %24 = vector.broadcast %cst_14 : f32 to vector<16x128xf32>
      %c0_15 = arith.constant 0 : index
      %c0_16 = arith.constant 0 : index
      %25 = vector.load %arg6[%c0_15, %c0_16] : memref<16x128xf32, #tpu.memory_space<vmem>>, vector<16x128xf32>
      tpu.vector_store %arg6[%c0_15, %c0_16], %24 {strides = array<i32>} : memref<16x128xf32, #tpu.memory_space<vmem>>, vector<16x128xf32>,
    } else {
    }
    %c0 = arith.constant 0 : index
    %c0_1 = arith.constant 0 : index
    %3 = vector.load %arg2[%c0, %c0_1] : memref<16x128xbf16, #tpu.memory_space<vmem>>, vector<16x128xbf16>
    %c0_2 = arith.constant 0 : index
    %c0_3 = arith.constant 0 : index
    %4 = vector.load %arg3[%c0_2, %c0_3] : memref<128x512xbf16, #tpu.memory_space<vmem>>, vector<128x512xbf16>
    %cst = arith.constant dense<0.000000e+00> : vector<16x512xf32>
    %5 = tpu.matmul %3, %4, %cst {dimension_numbers = #tpu.dot_dimension_numbers<[1], [0], [0], [1], [0, 0, 1, 1], [], []>} : vector<16x128xbf16>, vector<128x512xbf16>, vector<16x512xf32> -> vector<16x512xf32>
    %6 = vector.extract_strided_slice %5 {offsets = [0, 0], sizes = [16, 256], strides = [1, 1]} : vector<16x512xf32> to vector<16x256xf32>
    %7 = vector.extract_strided_slice %5 {offsets = [0, 256], sizes = [16, 256], strides = [1, 1]} : vector<16x512xf32> to vector<16x256xf32>
    %8 = arith.negf %6 : vector<16x256xf32>
    %9 = math.exp %8 : vector<16x256xf32>
    %cst_4 = arith.constant 1.000000e+00 : f32
    %10 = vector.broadcast %cst_4 : f32 to vector<16x256xf32>
    %11 = arith.addf %10, %9 : vector<16x256xf32>
    %12 = arith.divf %10, %11 : vector<16x256xf32>
    %13 = arith.mulf %6, %12 : vector<16x256xf32>
    %14 = arith.mulf %13, %7 : vector<16x256xf32>
    %c0_5 = arith.constant 0 : index
    %c0_6 = arith.constant 0 : index
    %15 = vector.load %arg6[%c0_5, %c0_6] : memref<16x128xf32, #tpu.memory_space<vmem>>, vector<16x128xf32>
    %16 = arith.truncf %14 : vector<16x256xf32> to vector<16x256xbf16>
    %c0_7 = arith.constant 0 : index
    %c0_8 = arith.constant 0 : index
    %17 = vector.load %arg4[%c0_7, %c0_8] : memref<256x128xbf16, #tpu.memory_space<vmem>>, vector<256x128xbf16>
    %cst_9 = arith.constant dense<0.000000e+00> : vector<16x128xf32>
    %18 = tpu.matmul %16, %17, %cst_9 {dimension_numbers = #tpu.dot_dimension_numbers<[1], [0], [0], [1], [0, 0, 1, 1], [], []>} : vector<16x256xbf16>, vector<256x128xbf16>, vector<16x128xf32> -> vector<16x128xf32>
    %19 = arith.addf %15, %18 : vector<16x128xf32>
    %c0_10 = arith.constant 0 : index
    %c0_11 = arith.constant 0 : index
    %20 = vector.load %arg6[%c0_10, %c0_11] : memref<16x128xf32, #tpu.memory_space<vmem>>, vector<16x128xf32>
    tpu.vector_store %arg6[%c0_10, %c0_11], %19 {strides = array<i32>} : memref<16x128xf32, #tpu.memory_space<vmem>>, vector<16x128xf32>,
    %c0_i32_12 = arith.constant 0 : i32
    %21 = arith.cmpi eq, %arg1, %c0_i32_12 : i32
    %22 = arith.extui %21 : i1 to i32
    %c0_i32_13 = arith.constant 0 : i32
    %23 = arith.cmpi ne, %22, %c0_i32_13 : i32
    scf.if %23 {
      %c0_14 = arith.constant 0 : index
      %c0_15 = arith.constant 0 : index
      %24 = vector.load %arg6[%c0_14, %c0_15] : memref<16x128xf32, #tpu.memory_space<vmem>>, vector<16x128xf32>
      %25 = arith.truncf %24 : vector<16x128xf32> to vector<16x128xbf16>
      %c0_16 = arith.constant 0 : index
      %c0_17 = arith.constant 0 : index
      %26 = vector.load %arg5[%c0_16, %c0_17] : memref<16x128xbf16, #tpu.memory_space<vmem>>, vector<16x128xbf16>
      tpu.vector_store %arg5[%c0_16, %c0_17], %25 {strides = array<i32>} : memref<16x128xbf16, #tpu.memory_space<vmem>>, vector<16x128xbf16>,
    } else {
    }
    return
  }
  func.func @transform_0(%arg0: i32, %arg1: i32) -> (i32, i32) {
    %c0_i32 = arith.constant 0 : i32
    %c0_i32_0 = arith.constant 0 : i32
    return %arg0, %c0_i32 : i32, i32
  }
  func.func @transform_1(%arg0: i32, %arg1: i32) -> (i32, i32) {
    %c0_i32 = arith.constant 0 : i32
    %c0_i32_0 = arith.constant 0 : i32
    return %c0_i32, %arg1 : i32, i32
  }
  func.func @transform_2(%arg0: i32, %arg1: i32) -> (i32, i32) {
    %c0_i32 = arith.constant 0 : i32
    %c0_i32_0 = arith.constant 0 : i32
    return %arg1, %c0_i32 : i32, i32
  }
  func.func @transform_3(%arg0: i32, %arg1: i32) -> (i32, i32) {
    %c0_i32 = arith.constant 0 : i32
    %c0_i32_0 = arith.constant 0 : i32
    return %arg0, %c0_i32 : i32, i32
  }
}

</mosaic_0001>

<llo_original>
// kernel: mistral_mlp_fused.1
$region0: #{mistral_mlp_fused.1}
  #allocation0 [shape = 'u32[]', space=smem, size = 0x4, offset = 0x4, fixed_abs, tag = 'smem constant byte address 0x4 - core index']
  #allocation1 [shape = 'u32[144,128]{1,0:T(1,128)}', space=vmem, size = 0x12000, scoped, tag = 'internal scratch']
  #allocation2 [shape = 'f32[16,128]{1,0:T(8,128)}', space=vmem, size = 0x2000, scoped, tag = 'scratch operand']
  %s0 = inlined_call_operand.vmem [shape: bf16[16,128], index: 0, kind: input, shape index: {}]
  %s1 = inlined_call_operand.hbm [shape: bf16[128,512], index: 1, kind: input, shape index: {}]
  %s2 = inlined_call_operand.hbm [shape: bf16[256,128], index: 2, kind: input, shape index: {}]
  %s3 = inlined_call_operand.vmem [shape: bf16[16,128], index: 3, kind: output, shape index: {}]
  %s4 = sld [smem:[#allocation0]]
  $region38: #{mistral_mlp_fused.1} parent=0
    _
  %s6 = ssub.s32 1, %s4
  %s7 = scalar_select 0, %s6, %s4
  $region1: #{mistral_mlp_fused.1} parent=0
    #allocation3 [shape = 'u8[131072]{0}', space=vmem, size = 0x20000, scoped, tag = 'input window, operand 1, single buffered']
    #allocation4 [shape = 's32[1]{0}', space=sflag, size = 0x4, scoped, tag = 'scoped memory for mistral_mlp_fused.1']
    #allocation5 [shape = 'u8[65536]{0}', space=vmem, size = 0x10000, scoped, tag = 'input window, operand 2, single buffered']
    #allocation6 [shape = 's32[1]{0}', space=sflag, size = 0x4, scoped, tag = 'scoped memory for mistral_mlp_fused.1']
    %8 = vsyncpa [#allocation4], 0
    %9 = vsyncpa [#allocation6], 0
    // Predicated region
    $region2: #{mistral_mlp_fused.1} parent=1 // pred_check
      _
    $region3: #{mistral_mlp_fused.1} parent=1 // pred_check_branch
      %11 = sbr.rel (0) target = $region5
    $region4: #{mistral_mlp_fused.1} parent=1 // pred_region
      _
    $region5: #{mistral_mlp_fused.1} parent=1 // pred_fallthru
      _
    // Predicated region
    $region6: #{mistral_mlp_fused.1} parent=1 // pred_check
      _
    $region7: #{mistral_mlp_fused.1} parent=1 // pred_check_branch
      %13 = sbr.rel (0) target = $region9
    $region8: #{mistral_mlp_fused.1} parent=1 // pred_region
      %s15 = ssub.s32 4096, 4096
      %16 = vsyncadd [#allocation4], %s15
      %s17 = sshll.u32 [#allocation3], 4
      %s18 = int_to_ptr.vmem [resolvable:$true] %s17
      %23 = dma.hbm_to_vmem [thread:$0]  %s1, 4096, %s18, [#allocation4], 256, 256, 16
    $region9: #{mistral_mlp_fused.1} parent=1 // pred_fallthru
      _
    // Predicated region
    $region10: #{mistral_mlp_fused.1} parent=1 // pred_check
      _
    $region11: #{mistral_mlp_fused.1} parent=1 // pred_check_branch
      %25 = sbr.rel (0) target = $region13
    $region12: #{mistral_mlp_fused.1} parent=1 // pred_region
      %s27 = ssub.s32 2048, 2048
      %28 = vsyncadd [#allocation6], %s27
      %s29 = sshll.u32 [#allocation5], 4
      %s30 = int_to_ptr.vmem [resolvable:$true] %s29
      %35 = dma.hbm_to_vmem [thread:$0]  %s2, 2048, %s30, [#allocation6], 64, 64, 4
    $region13: #{mistral_mlp_fused.1} parent=1 // pred_fallthru
      _
    // Predicated region
    $region14: #{mistral_mlp_fused.1} parent=1 // pred_check
      _
    $region15: #{mistral_mlp_fused.1} parent=1 // pred_check_branch
      %37 = sbr.rel (0) target = $region17
    $region16: #{mistral_mlp_fused.1} parent=1 // pred_region
      %38 = dma.done [#allocation4], 4096
    $region17: #{mistral_mlp_fused.1} parent=1 // pred_fallthru
      _
    // Predicated region
    $region18: #{mistral_mlp_fused.1} parent=1 // pred_check
      _
    $region19: #{mistral_mlp_fused.1} parent=1 // pred_check_branch
      %40 = sbr.rel (0) target = $region21
    $region20: #{mistral_mlp_fused.1} parent=1 // pred_region
      %41 = dma.done [#allocation6], 2048
    $region21: #{mistral_mlp_fused.1} parent=1 // pred_fallthru
      _
    %p43 = scmp.eq.s32.totalorder 0, 0
    // Predicated region
    $region22: #{mistral_mlp_fused.1} parent=1 // pred_check
      %p44 = pneg %p43
    $region23: #{mistral_mlp_fused.1} parent=1 // pred_check_branch
      %46 = sbr.rel (%p44) target = $region25
    $region24: #{mistral_mlp_fused.1} parent=1 // pred_region
      %47 = vst [vmem:[#allocation2] sm:$0xff] 0.0
      %48 = vst [vmem:[#allocation2 + $0x8] sm:$0xff] 0.0
    $region25: #{mistral_mlp_fused.1} parent=1 // pred_fallthru
      _
    %v49 = vld [vmem:[%s0] sm:$0xf]
    %v50 = vld [vmem:[%s0 + $0x4] sm:$0xf]
    %v51 = vld [vmem:[#allocation3] sm:$0xff]
    %v52 = vld [vmem:[#allocation3 + $0x8] sm:$0xff]
    %v53 = vld [vmem:[#allocation3 + $0x10] sm:$0xff]
    %v54 = vld [vmem:[#allocation3 + $0x18] sm:$0xff]
    %v55 = vld [vmem:[#allocation3 + $0x20] sm:$0xff]
    %v56 = vld [vmem:[#allocation3 + $0x28] sm:$0xff]
    %v57 = vld [vmem:[#allocation3 + $0x30] sm:$0xff]
    %v58 = vld [vmem:[#allocation3 + $0x38] sm:$0xff]
    %v59 = vld [vmem:[#allocation3 + $0x40] sm:$0xff]
    %v60 = vld [vmem:[#allocation3 + $0x48] sm:$0xff]
    %v61 = vld [vmem:[#allocation3 + $0x50] sm:$0xff]
    %v62 = vld [vmem:[#allocation3 + $0x58] sm:$0xff]
    %v63 = vld [vmem:[#allocation3 + $0x60] sm:$0xff]
    %v64 = vld [vmem:[#allocation3 + $0x68] sm:$0xff]
    %v65 = vld [vmem:[#allocation3 + $0x70] sm:$0xff]
    %v66 = vld [vmem:[#allocation3 + $0x78] sm:$0xff]
    %v67 = vld [vmem:[#allocation3 + $0x80] sm:$0xff]
    %v68 = vld [vmem:[#allocation3 + $0x88] sm:$0xff]
    %v69 = vld [vmem:[#allocation3 + $0x90] sm:$0xff]
    %v70 = vld [vmem:[#allocation3 + $0x98] sm:$0xff]
    %v71 = vld [vmem:[#allocation3 + $0xa0] sm:$0xff]
    %v72 = vld [vmem:[#allocation3 + $0xa8] sm:$0xff]
    %v73 = vld [vmem:[#allocation3 + $0xb0] sm:$0xff]
    %v74 = vld [vmem:[#allocation3 + $0xb8] sm:$0xff]
    %v75 = vld [vmem:[#allocation3 + $0xc0] sm:$0xff]
    %v76 = vld [vmem:[#allocation3 + $0xc8] sm:$0xff]
    %v77 = vld [vmem:[#allocation3 + $0xd0] sm:$0xff]
    %v78 = vld [vmem:[#allocation3 + $0xd8] sm:$0xff]
    %v79 = vld [vmem:[#allocation3 + $0xe0] sm:$0xff]
    %v80 = vld [vmem:[#allocation3 + $0xe8] sm:$0xff]
    %v81 = vld [vmem:[#allocation3 + $0xf0] sm:$0xff]
    %v82 = vld [vmem:[#allocation3 + $0xf8] sm:$0xff]
    %v85 = vunpack.c.l.b16 %v49
    %v86 = vunpack.c.l.b16 %v50
    %v87 = vpack.c.b16 %v86, %v85
    %v121 = vunpack.c.l.b16 %v51
    %v122 = vunpack.c.h.b16 %v51
    %v123 = vunpack.c.l.b16 %v52
    %v124 = vunpack.c.h.b16 %v52
    %v125 = vunpack.c.l.b16 %v53
    %v126 = vunpack.c.h.b16 %v53
    %v127 = vunpack.c.l.b16 %v54
    %v128 = vunpack.c.h.b16 %v54
    %v129 = vunpack.c.l.b16 %v55
    %v130 = vunpack.c.h.b16 %v55
    %v131 = vunpack.c.l.b16 %v56
    %v132 = vunpack.c.h.b16 %v56
    %v133 = vunpack.c.l.b16 %v57
    %v134 = vunpack.c.h.b16 %v57
    %v135 = vunpack.c.l.b16 %v58
    %v136 = vunpack.c.h.b16 %v58
    %v137 = vunpack.c.l.b16 %v59
    %v138 = vunpack.c.h.b16 %v59
    %v139 = vunpack.c.l.b16 %v60
    %v140 = vunpack.c.h.b16 %v60
    %v141 = vunpack.c.l.b16 %v61
    %v142 = vunpack.c.h.b16 %v61
    %v143 = vunpack.c.l.b16 %v62
    %v144 = vunpack.c.h.b16 %v62
    %v145 = vunpack.c.l.b16 %v63
    %v146 = vunpack.c.h.b16 %v63
    %v147 = vunpack.c.l.b16 %v64
    %v148 = vunpack.c.h.b16 %v64
    %v149 = vunpack.c.l.b16 %v65
    %v150 = vunpack.c.h.b16 %v65
    %v151 = vunpack.c.l.b16 %v66
    %v152 = vunpack.c.h.b16 %v66
    %v153 = vunpack.c.l.b16 %v67
    %v154 = vunpack.c.h.b16 %v67
    %v155 = vunpack.c.l.b16 %v68
    %v156 = vunpack.c.h.b16 %v68
    %v157 = vunpack.c.l.b16 %v69
    %v158 = vunpack.c.h.b16 %v69
    %v159 = vunpack.c.l.b16 %v70
    %v160 = vunpack.c.h.b16 %v70
    %v161 = vunpack.c.l.b16 %v71
    %v162 = vunpack.c.h.b16 %v71
    %v163 = vunpack.c.l.b16 %v72
    %v164 = vunpack.c.h.b16 %v72
    %v165 = vunpack.c.l.b16 %v73
    %v166 = vunpack.c.h.b16 %v73
    %v167 = vunpack.c.l.b16 %v74
    %v168 = vunpack.c.h.b16 %v74
    %v169 = vunpack.c.l.b16 %v75
    %v170 = vunpack.c.h.b16 %v75
    %v171 = vunpack.c.l.b16 %v76
    %v172 = vunpack.c.h.b16 %v76
    %v173 = vunpack.c.l.b16 %v77
    %v174 = vunpack.c.h.b16 %v77
    %v175 = vunpack.c.l.b16 %v78
    %v176 = vunpack.c.h.b16 %v78
    %v177 = vunpack.c.l.b16 %v79
    %v178 = vunpack.c.h.b16 %v79
    %v179 = vunpack.c.l.b16 %v80
    %v180 = vunpack.c.h.b16 %v80
    %v181 = vunpack.c.l.b16 %v81
    %v182 = vunpack.c.h.b16 %v81
    %v183 = vunpack.c.l.b16 %v82
    %v184 = vunpack.c.h.b16 %v82
    %v185 = vpack.c.b16 %v125, %v121
    %v186 = vpack.c.b16 %v126, %v122
    %v187 = vpack.c.b16 %v127, %v123
    %v188 = vpack.c.b16 %v128, %v124
    %v189 = vpack.c.b16 %v133, %v129
    %v190 = vpack.c.b16 %v134, %v130
    %v191 = vpack.c.b16 %v135, %v131
    %v192 = vpack.c.b16 %v136, %v132
    %v193 = vpack.c.b16 %v141, %v137
    %v194 = vpack.c.b16 %v142, %v138
    %v195 = vpack.c.b16 %v143, %v139
    %v196 = vpack.c.b16 %v144, %v140
    %v197 = vpack.c.b16 %v149, %v145
    %v198 = vpack.c.b16 %v150, %v146
    %v199 = vpack.c.b16 %v151, %v147
    %v200 = vpack.c.b16 %v152, %v148
    %v201 = vpack.c.b16 %v157, %v153
    %v202 = vpack.c.b16 %v158, %v154
    %v203 = vpack.c.b16 %v159, %v155
    %v204 = vpack.c.b16 %v160, %v156
    %v205 = vpack.c.b16 %v165, %v161
    %v206 = vpack.c.b16 %v166, %v162
    %v207 = vpack.c.b16 %v167, %v163
    %v208 = vpack.c.b16 %v168, %v164
    %v209 = vpack.c.b16 %v173, %v169
    %v210 = vpack.c.b16 %v174, %v170
    %v211 = vpack.c.b16 %v175, %v171
    %v212 = vpack.c.b16 %v176, %v172
    %v213 = vpack.c.b16 %v181, %v177
    %v214 = vpack.c.b16 %v182, %v178
    %v215 = vpack.c.b16 %v183, %v179
    %v216 = vpack.c.b16 %v184, %v180
    %249 = vmatprep.subr.bf16.mxu0 %v214
    %250 = vmatpush1.bf16.msra.mxu0 %v213
    %251 = vmatprep.subr.bf16.mxu0 %v210
    %252 = vmatpush1.bf16.msra.mxu0 %v209
    %253 = vmatprep.subr.bf16.mxu0 %v206
    %254 = vmatpush1.bf16.msra.mxu0 %v205
    %255 = vmatprep.subr.bf16.mxu0 %v202
    %256 = vmatpush1.bf16.msra.mxu0 %v201
    %257 = vmatprep.subr.bf16.mxu0 %v198
    %258 = vmatpush1.bf16.msra.mxu0 %v197
    %259 = vmatprep.subr.bf16.mxu0 %v194
    %260 = vmatpush1.bf16.msra.mxu0 %v193
    %261 = vmatprep.subr.bf16.mxu0 %v190
    %262 = vmatpush1.bf16.msra.mxu0 %v189
    %263 = vmatprep.subr.bf16.mxu0 %v186
    %264 = vmatpush1.bf16.msra.mxu0 %v185
    %265 = vmatprep.subr.bf16.mxu0 0
    %266 = vmatpush2.bf16.msra.mxu0 0
    %267 = vmatprep.subr.bf16.mxu0 0
    %268 = vmatpush2.bf16.msra.mxu0 0
    %269 = vmatprep.subr.bf16.mxu0 0
    %270 = vmatpush2.bf16.msra.mxu0 0
    %271 = vmatprep.subr.bf16.mxu0 0
    %272 = vmatpush2.bf16.msra.mxu0 0
    %273 = vmatprep.subr.bf16.mxu0 0
    %274 = vmatpush2.bf16.msra.mxu0 0
    %275 = vmatprep.subr.bf16.mxu0 0
    %276 = vmatpush2.bf16.msra.mxu0 0
    %277 = vmatprep.subr.bf16.mxu0 0
    %278 = vmatpush2.bf16.msra.mxu0 0
    %279 = vmatprep.subr.bf16.mxu0 0
    %280 = vmatpush2.bf16.msra.mxu0 0
    %281 = vmatprep.mubr.bf16.mxu0 0
    %282 = vmatmul.mubr.bf16.gmra.mxu0 %v87
    %v283 = vpop.f32.mrf.mxu0
    %v284 = vadd.f32 0.0, %v283
    %v285 = vpop.f32.mrf.mxu0
    %v286 = vadd.f32 0.0, %v285
    %v287 = vpop.f32.mrf.mxu0
    %v288 = vadd.f32 0.0, %v287
    %v289 = vpop.f32.mrf.mxu0
    %v290 = vadd.f32 0.0, %v289
    %291 = vdwg.mxu0
    %292 = vmatprep.subr.bf16.mxu0 %v216
    %293 = vmatpush1.bf16.msra.mxu0 %v215
    %294 = vmatprep.subr.bf16.mxu0 %v212
    %295 = vmatpush1.bf16.msra.mxu0 %v211
    %296 = vmatprep.subr.bf16.mxu0 %v208
    %297 = vmatpush1.bf16.msra.mxu0 %v207
    %298 = vmatprep.subr.bf16.mxu0 %v204
    %299 = vmatpush1.bf16.msra.mxu0 %v203
    %300 = vmatprep.subr.bf16.mxu0 %v200
    %301 = vmatpush1.bf16.msra.mxu0 %v199
    %302 = vmatprep.subr.bf16.mxu0 %v196
    %303 = vmatpush1.bf16.msra.mxu0 %v195
    %304 = vmatprep.subr.bf16.mxu0 %v192
    %305 = vmatpush1.bf16.msra.mxu0 %v191
    %306 = vmatprep.subr.bf16.mxu0 %v188
    %307 = vmatpush1.bf16.msra.mxu0 %v187
    %308 = vmatprep.subr.bf16.mxu0 0
    %309 = vmatpush2.bf16.msra.mxu0 0
    %310 = vmatprep.subr.bf16.mxu0 0
    %311 = vmatpush2.bf16.msra.mxu0 0
    %312 = vmatprep.subr.bf16.mxu0 0
    %313 = vmatpush2.bf16.msra.mxu0 0
    %314 = vmatprep.subr.bf16.mxu0 0
    %315 = vmatpush2.bf16.msra.mxu0 0
    %316 = vmatprep.subr.bf16.mxu0 0
    %317 = vmatpush2.bf16.msra.mxu0 0
    %318 = vmatprep.subr.bf16.mxu0 0
    %319 = vmatpush2.bf16.msra.mxu0 0
    %320 = vmatprep.subr.bf16.mxu0 0
    %321 = vmatpush2.bf16.msra.mxu0 0
    %322 = vmatprep.subr.bf16.mxu0 0
    %323 = vmatpush2.bf16.msra.mxu0 0
    %324 = vmatprep.mubr.bf16.mxu0 0
    %325 = vmatmul.mubr.bf16.gmra.mxu0 %v87
    %v326 = vpop.f32.mrf.mxu0
    %v327 = vadd.f32 0.0, %v326
    %v328 = vpop.f32.mrf.mxu0
    %v329 = vadd.f32 0.0, %v328
    %v330 = vpop.f32.mrf.mxu0
    %v331 = vadd.f32 0.0, %v330
    %v332 = vpop.f32.mrf.mxu0
    %v333 = vadd.f32 0.0, %v332
    %334 = vdwg.mxu0
    %v335 = vxor.u32 %v284, 2147483648
    %v336 = vxor.u32 %v286, 2147483648
    %v337 = vxor.u32 %v288, 2147483648
    %v338 = vxor.u32 %v290, 2147483648
    %v339 = vmul.f32 %v335, 1.442695
    %v340 = vpow.pop %v339
    %v341 = vmul.f32 %v336, 1.442695
    %v342 = vpow.pop %v341
    %v343 = vmul.f32 %v337, 1.442695
    %v344 = vpow.pop %v343
    %v345 = vmul.f32 %v338, 1.442695
    %v346 = vpow.pop %v345
    %v347 = vadd.f32 %v340, 1.0
    %v348 = vadd.f32 %v342, 1.0
    %v349 = vadd.f32 %v344, 1.0
    %v350 = vadd.f32 %v346, 1.0
    %v351 = vrcp.pop %v347
    %v352 = vmul.f32 1.0, %v351
    %v353 = vrcp.pop %v348
    %v354 = vmul.f32 1.0, %v353
    %v355 = vrcp.pop %v349
    %v356 = vmul.f32 1.0, %v355
    %v357 = vrcp.pop %v350
    %v358 = vmul.f32 1.0, %v357
    %v359 = vmul.f32 %v284, %v352
    %v360 = vmul.f32 %v286, %v354
    %v361 = vmul.f32 %v288, %v356
    %v362 = vmul.f32 %v290, %v358
    %v363 = vmul.f32 %v359, %v327
    %v364 = vmul.f32 %v360, %v329
    %v365 = vmul.f32 %v361, %v331
    %v366 = vmul.f32 %v362, %v333
    %v367 = vld [vmem:[#allocation2] sm:$0xff]
    %v368 = vld [vmem:[#allocation2 + $0x8] sm:$0xff]
    %v369 = vpack.c.bf16 %v365, %v363
    %v370 = vpack.c.bf16 %v366, %v364
    %v371 = vld [vmem:[#allocation5] sm:$0xf]
    %v372 = vld [vmem:[#allocation5 + $0x4] sm:$0xf]
    %v373 = vld [vmem:[#allocation5 + $0x8] sm:$0xf]
    %v374 = vld [vmem:[#allocation5 + $0xc] sm:$0xf]
    %v375 = vld [vmem:[#allocation5 + $0x10] sm:$0xf]
    %v376 = vld [vmem:[#allocation5 + $0x14] sm:$0xf]
    %v377 = vld [vmem:[#allocation5 + $0x18] sm:$0xf]
    %v378 = vld [vmem:[#allocation5 + $0x1c] sm:$0xf]
    %v379 = vld [vmem:[#allocation5 + $0x20] sm:$0xf]
    %v380 = vld [vmem:[#allocation5 + $0x24] sm:$0xf]
    %v381 = vld [vmem:[#allocation5 + $0x28] sm:$0xf]
    %v382 = vld [vmem:[#allocation5 + $0x2c] sm:$0xf]
    %v383 = vld [vmem:[#allocation5 + $0x30] sm:$0xf]
    %v384 = vld [vmem:[#allocation5 + $0x34] sm:$0xf]
    %v385 = vld [vmem:[#allocation5 + $0x38] sm:$0xf]
    %v386 = vld [vmem:[#allocation5 + $0x3c] sm:$0xf]
    %v387 = vld [vmem:[#allocation5 + $0x40] sm:$0xf]
    %v388 = vld [vmem:[#allocation5 + $0x44] sm:$0xf]
    %v389 = vld [vmem:[#allocation5 + $0x48] sm:$0xf]
    %v390 = vld [vmem:[#allocation5 + $0x4c] sm:$0xf]
    %v391 = vld [vmem:[#allocation5 + $0x50] sm:$0xf]
    %v392 = vld [vmem:[#allocation5 + $0x54] sm:$0xf]
    %v393 = vld [vmem:[#allocation5 + $0x58] sm:$0xf]
    %v394 = vld [vmem:[#allocation5 + $0x5c] sm:$0xf]
    %v395 = vld [vmem:[#allocation5 + $0x60] sm:$0xf]
    %v396 = vld [vmem:[#allocation5 + $0x64] sm:$0xf]
    %v397 = vld [vmem:[#allocation5 + $0x68] sm:$0xf]
    %v398 = vld [vmem:[#allocation5 + $0x6c] sm:$0xf]
    %v399 = vld [vmem:[#allocation5 + $0x70] sm:$0xf]
    %v400 = vld [vmem:[#allocation5 + $0x74] sm:$0xf]
    %v401 = vld [vmem:[#allocation5 + $0x78] sm:$0xf]
    %v402 = vld [vmem:[#allocation5 + $0x7c] sm:$0xf]
    %v435 = vunpack.c.l.b16 %v371
    %v436 = vunpack.c.l.b16 %v372
    %v437 = vunpack.c.l.b16 %v373
    %v438 = vunpack.c.l.b16 %v374
    %v439 = vunpack.c.l.b16 %v375
    %v440 = vunpack.c.l.b16 %v376
    %v441 = vunpack.c.l.b16 %v377
    %v442 = vunpack.c.l.b16 %v378
    %v443 = vunpack.c.l.b16 %v379
    %v444 = vunpack.c.l.b16 %v380
    %v445 = vunpack.c.l.b16 %v381
    %v446 = vunpack.c.l.b16 %v382
    %v447 = vunpack.c.l.b16 %v383
    %v448 = vunpack.c.l.b16 %v384
    %v449 = vunpack.c.l.b16 %v385
    %v450 = vunpack.c.l.b16 %v386
    %v451 = vunpack.c.l.b16 %v387
    %v452 = vunpack.c.l.b16 %v388
    %v453 = vunpack.c.l.b16 %v389
    %v454 = vunpack.c.l.b16 %v390
    %v455 = vunpack.c.l.b16 %v391
    %v456 = vunpack.c.l.b16 %v392
    %v457 = vunpack.c.l.b16 %v393
    %v458 = vunpack.c.l.b16 %v394
    %v459 = vunpack.c.l.b16 %v395
    %v460 = vunpack.c.l.b16 %v396
    %v461 = vunpack.c.l.b16 %v397
    %v462 = vunpack.c.l.b16 %v398
    %v463 = vunpack.c.l.b16 %v399
    %v464 = vunpack.c.l.b16 %v400
    %v465 = vunpack.c.l.b16 %v401
    %v466 = vunpack.c.l.b16 %v402
    %v467 = vpack.c.b16 %v436, %v435
    %v468 = vpack.c.b16 %v438, %v437
    %v469 = vpack.c.b16 %v440, %v439
    %v470 = vpack.c.b16 %v442, %v441
    %v471 = vpack.c.b16 %v444, %v443
    %v472 = vpack.c.b16 %v446, %v445
    %v473 = vpack.c.b16 %v448, %v447
    %v474 = vpack.c.b16 %v450, %v449
    %v475 = vpack.c.b16 %v452, %v451
    %v476 = vpack.c.b16 %v454, %v453
    %v477 = vpack.c.b16 %v456, %v455
    %v478 = vpack.c.b16 %v458, %v457
    %v479 = vpack.c.b16 %v460, %v459
    %v480 = vpack.c.b16 %v462, %v461
    %v481 = vpack.c.b16 %v464, %v463
    %v482 = vpack.c.b16 %v466, %v465
    %499 = vmatprep.subr.bf16.mxu0 0
    %500 = vmatpush1.bf16.msra.mxu0 %v474
    %501 = vmatprep.subr.bf16.mxu0 0
    %502 = vmatpush1.bf16.msra.mxu0 %v473
    %503 = vmatprep.subr.bf16.mxu0 0
    %504 = vmatpush1.bf16.msra.mxu0 %v472
    %505 = vmatprep.subr.bf16.mxu0 0
    %506 = vmatpush1.bf16.msra.mxu0 %v471
    %507 = vmatprep.subr.bf16.mxu0 0
    %508 = vmatpush1.bf16.msra.mxu0 %v470
    %509 = vmatprep.subr.bf16.mxu0 0
    %510 = vmatpush1.bf16.msra.mxu0 %v469
    %511 = vmatprep.subr.bf16.mxu0 0
    %512 = vmatpush1.bf16.msra.mxu0 %v468
    %513 = vmatprep.subr.bf16.mxu0 0
    %514 = vmatpush1.bf16.msra.mxu0 %v467
    %515 = vmatprep.subr.bf16.mxu0 0
    %516 = vmatpush2.bf16.msra.mxu0 %v482
    %517 = vmatprep.subr.bf16.mxu0 0
    %518 = vmatpush2.bf16.msra.mxu0 %v481
    %519 = vmatprep.subr.bf16.mxu0 0
    %520 = vmatpush2.bf16.msra.mxu0 %v480
    %521 = vmatprep.subr.bf16.mxu0 0
    %522 = vmatpush2.bf16.msra.mxu0 %v479
    %523 = vmatprep.subr.bf16.mxu0 0
    %524 = vmatpush2.bf16.msra.mxu0 %v478
    %525 = vmatprep.subr.bf16.mxu0 0
    %526 = vmatpush2.bf16.msra.mxu0 %v477
    %527 = vmatprep.subr.bf16.mxu0 0
    %528 = vmatpush2.bf16.msra.mxu0 %v476
    %529 = vmatprep.subr.bf16.mxu0 0
    %530 = vmatpush2.bf16.msra.mxu0 %v475
    %531 = vmatprep.mubr.bf16.mxu0 %v370
    %532 = vmatmul.mubr.bf16.gmra.mxu0 %v369
    %v533 = vpop.f32.mrf.mxu0
    %v534 = vadd.f32 0.0, %v533
    %v535 = vpop.f32.mrf.mxu0
    %v536 = vpop.f32.mrf.mxu0
    %v537 = vadd.f32 0.0, %v536
    %v538 = vpop.f32.mrf.mxu0
    %539 = vdwg.mxu0
    %v540 = vadd.f32 %v367, %v534
    %v541 = vadd.f32 %v368, %v537
    %542 = vst [vmem:[#allocation2] sm:$0xff] %v540
    %543 = vst [vmem:[#allocation2 + $0x8] sm:$0xff] %v541
    // Predicated region
    $region26: #{mistral_mlp_fused.1} parent=1 // pred_check
      %p544 = pneg %p43
    $region27: #{mistral_mlp_fused.1} parent=1 // pred_check_branch
      %546 = sbr.rel (%p544) target = $region29
    $region28: #{mistral_mlp_fused.1} parent=1 // pred_region
      %v547 = vld [vmem:[#allocation2] sm:$0xff]
      %v548 = vld [vmem:[#allocation2 + $0x8] sm:$0xff]
      %v549 = vpack.c.bf16 %v548, %v547
      %v551 = vunpack.c.l.b16 %v549
      %v552 = vunpack.c.h.b16 %v549
      %v553 = vpack.c.b16 %v551, %v551
      %v554 = vpack.c.b16 %v552, %v552
      %557 = vst [vmem:[%s3] sm:$0xf] %v553
      %558 = vst [vmem:[%s3 + $0x4] sm:$0xf] %v554
    $region29: #{mistral_mlp_fused.1} parent=1 // pred_fallthru
      _
    // Predicated region
    $region30: #{mistral_mlp_fused.1} parent=1 // pred_check
      _
    $region31: #{mistral_mlp_fused.1} parent=1 // pred_check_branch
      %560 = sbr.rel (0) target = $region33
    $region32: #{mistral_mlp_fused.1} parent=1 // pred_region
      _
    $region33: #{mistral_mlp_fused.1} parent=1 // pred_fallthru
      _
    // Predicated region
    $region34: #{mistral_mlp_fused.1} parent=1 // pred_check
      _
    $region35: #{mistral_mlp_fused.1} parent=1 // pred_check_branch
      %562 = sbr.rel (0) target = $region37
    $region36: #{mistral_mlp_fused.1} parent=1 // pred_region
      _
    $region37: #{mistral_mlp_fused.1} parent=1 // pred_fallthru
      _
    %563 = vsyncpa [#allocation4], 1
    %564 = vsyncpa [#allocation6], 1

</llo_original>
